<compile_context>
chip_gen: v7x
topology: tpu7x:2x2x1
jax: 0.10.0
libtpu: 0.0.40
codegen_flags: <defaults>
</compile_context>

<pallas_src>
import math

import jax
import jax.numpy as jnp
from jax import lax
from jax.experimental import pallas as pl
from jax.experimental.pallas import tpu as pltpu


def _round_up(x, m):
    return (x + m - 1) // m * m


def _layernorm(x, gamma, beta, eps=1e-5):
    mean = jnp.mean(x, axis=-1, keepdims=True)
    var = jnp.mean(jnp.square(x - mean), axis=-1, keepdims=True)
    xhat = (x - mean) * lax.rsqrt(var + eps)
    return xhat * gamma + beta


def _gelu_exact(x):
    # PyTorch nn.GELU() default = exact erf formulation.
    return 0.5 * x * (1.0 + lax.erf(x * (1.0 / math.sqrt(2.0))))


def _mm_bf16(a_f32, w_bf16):
    # bf16 operands, f32 accumulation on the MXU.
    return jnp.dot(a_f32.astype(jnp.bfloat16), w_bf16,
                   preferred_element_type=jnp.float32)


# --------------------------------------------------------------------------- #
# Kernel 1: the two small Linear+LN+GELU layers, once per batch tile.
# --------------------------------------------------------------------------- #
def mlp_kernel(x_ref, w1_ref, b1_ref, g1_ref, be1_ref,
               w2_ref, b2_ref, g2_ref, be2_ref, h_ref):
    x = x_ref[...].astype(jnp.float32)                       # [bt, D]

    # Linear(D -> 2D) + LayerNorm(2D) + GELU   (Dropout = identity at inference)
    h = _mm_bf16(x, w1_ref[...]) + b1_ref[...]
    h = _gelu_exact(_layernorm(h, g1_ref[...], be1_ref[...]))

    # Linear(2D -> D) + LayerNorm(D) + GELU
    h = _mm_bf16(h, w2_ref[...]) + b2_ref[...]
    h = _gelu_exact(_layernorm(h, g2_ref[...], be2_ref[...]))

    # Hand off in bf16 (feeds a bf16 MXU matmul in the logits kernel anyway).
    h_ref[...] = h.astype(h_ref.dtype)


# --------------------------------------------------------------------------- #
# Kernel 2: logits = h @ w3 + b3, streamed over tag tiles (the dominant work).
# --------------------------------------------------------------------------- #
def logits_kernel(h_ref, w3_ref, b3_ref, temp_ref, out_ref):
    h = h_ref[...]                                            # bf16 [bt, D]
    logits = jnp.dot(h, w3_ref[0],                            # bf16 x bf16 -> f32 MXU
                     preferred_element_type=jnp.float32) + b3_ref[...]
    # divide by temperature (scalar from SMEM), clamp to [-15, 15]
    preds = jnp.clip(logits / temp_ref[0], -15.0, 15.0)
    out_ref[...] = preds.astype(out_ref.dtype)


def _pretile_w3(w3, b3, tn):
    """Pad T to a tn multiple and re-lay w3 as [Tp//tn, D, tn] contiguous tiles.

    In production, call this once at weight-load time and reuse the result."""
    D, T = w3.shape
    Tp = _round_up(T, tn)
    if Tp != T:
        w3 = jnp.pad(w3, ((0, 0), (0, Tp - T)))
        b3 = jnp.pad(b3, ((0, 0), (0, Tp - T)))
    w3t = jnp.transpose(w3.reshape(D, Tp // tn, tn), (1, 0, 2))   # [nt, D, tn]
    return w3t, b3, Tp


def refined_initial_emb_to_pred(features, params, *, bt=None, tn=None):
    B, D = features.shape
    H = 2 * D
    T = params["w3"].shape[1]

    # --- tile sizes ---
    # bt=256 fills the 2x256^2 MXU rows on v6e/v7x (v5e's 4x128^2 is fine either way).
    # tn=2048 keeps the logits kernel ~16 MiB of live VMEM -> safe on v7x's 64 MiB and
    # leaves room to raise tn to 4096+ on v5e/v6e if desired.
    if bt is None:
        bt = min(_round_up(B, 8), 256)
    if tn is None:
        tn = min(_round_up(T, 128), 2048)

    Bp = _round_up(B, bt)
    x = features if Bp == B else jnp.pad(features, ((0, Bp - B), (0, 0)))

    w3t, b3p, Tp = _pretile_w3(params["w3"], params["b3"], tn)
    n_t, n_b = Tp // tn, Bp // bt

    vmem_limit = 48 * 1024 * 1024   # safe on all generations (raise toward 96 MiB on v5e/v6e)

    # ---- small MLP: features [Bp, D] -> h [Bp, D] (bf16) ----
    h = pl.pallas_call(
        mlp_kernel,
        out_shape=jax.ShapeDtypeStruct((Bp, D), jnp.bfloat16),
        grid=(n_b,),
        in_specs=[
            pl.BlockSpec((bt, D), lambda i: (i, 0)),          # x
            pl.BlockSpec((D, H), lambda i: (0, 0)),           # w1 (bf16, resident)
            pl.BlockSpec((1, H), lambda i: (0, 0)),           # b1
            pl.BlockSpec((1, H), lambda i: (0, 0)),           # ln1 gamma
            pl.BlockSpec((1, H), lambda i: (0, 0)),           # ln1 beta
            pl.BlockSpec((H, D), lambda i: (0, 0)),           # w2 (bf16, resident)
            pl.BlockSpec((1, D), lambda i: (0, 0)),           # b2
            pl.BlockSpec((1, D), lambda i: (0, 0)),           # ln2 gamma
            pl.BlockSpec((1, D), lambda i: (0, 0)),           # ln2 beta
        ],
        out_specs=pl.BlockSpec((bt, D), lambda i: (i, 0)),
        compiler_params=pltpu.CompilerParams(
            dimension_semantics=("parallel",),
            vmem_limit_bytes=vmem_limit,
        ),
    )(
        x,
        params["w1"], params["b1"], params["g1"], params["be1"],
        params["w2"], params["b2"], params["g2"], params["be2"],
    )

    # ---- logits stream: h [Bp, D] x w3 [D, Tp] -> preds [Bp, Tp] ----
    # Tag tiles outermost so each contiguous w3 tile is DMA'd from HBM exactly once.
    out = pl.pallas_call(
        logits_kernel,
        out_shape=jax.ShapeDtypeStruct((Bp, Tp), jnp.float32),
        grid=(n_t, n_b),
        in_specs=[
            pl.BlockSpec((bt, D), lambda j, i: (i, 0)),       # h (bf16)
            pl.BlockSpec((1, D, tn), lambda j, i: (j, 0, 0)), # w3 tiles (bf16, contiguous)
            pl.BlockSpec((1, tn), lambda j, i: (0, j)),       # b3
            pl.BlockSpec(memory_space=pltpu.MemorySpace.SMEM),# temperature scalar
        ],
        out_specs=pl.BlockSpec((bt, tn), lambda j, i: (i, j)),
        compiler_params=pltpu.CompilerParams(
            dimension_semantics=("parallel", "parallel"),
            vmem_limit_bytes=vmem_limit,
        ),
    )(h, w3t, b3p, params["temperature"])

    return out[:B, :T]


def make_params(key, D, T):
    ks = jax.random.split(key, 6)
    scale = 0.02
    # weights stored as [in, out] (transposed vs torch nn.Linear's [out, in]) and in bf16
    w1 = (jax.random.normal(ks[0], (D, 2 * D), jnp.float32) * scale).astype(jnp.bfloat16)
    b1 = jax.random.normal(ks[1], (1, 2 * D), jnp.float32) * scale
    w2 = (jax.random.normal(ks[2], (2 * D, D), jnp.float32) * scale).astype(jnp.bfloat16)
    b2 = jax.random.normal(ks[3], (1, D), jnp.float32) * scale
    w3 = (jax.random.normal(ks[4], (D, T), jnp.float32) * scale).astype(jnp.bfloat16)
    b3 = jax.random.normal(ks[5], (1, T), jnp.float32) * scale
    # LayerNorm params: torch default init gamma=1, beta=0
    g1 = jnp.ones((1, 2 * D), jnp.float32)
    be1 = jnp.zeros((1, 2 * D), jnp.float32)
    g2 = jnp.ones((1, D), jnp.float32)
    be2 = jnp.zeros((1, D), jnp.float32)
    # temperature = 1.5 (nn.Parameter(torch.ones(1) * 1.5))
    temperature = jnp.full((1,), 1.5, jnp.float32)
    return dict(
        w1=w1, b1=b1, g1=g1, be1=be1,
        w2=w2, b2=b2, g2=g2, be2=be2,
        w3=w3, b3=b3, temperature=temperature,
    )


def reference_jax(features, p):
    # Mirrors the kernel's numerics: bf16 matmul operands, f32 accumulation / LN / GELU.
    # NOTE: the bf16 weight/activation casts deviate from PyTorch's fp32 nn.Linear at
    # ~1e-2 relative level; acceptable for this tagger head.
    h = _mm_bf16(features, p["w1"]) + p["b1"]
    h = _gelu_exact(_layernorm(h, p["g1"], p["be1"]))
    h = _mm_bf16(h, p["w2"]) + p["b2"]
    h = _gelu_exact(_layernorm(h, p["g2"], p["be2"]))
    logits = _mm_bf16(h, p["w3"]) + p["b3"]
    return jnp.clip(logits / p["temperature"][0], -15.0, 15.0)


if __name__ == "__main__":
    # Small shapes consistent with the head: features [B, D], total_tags = T.
    # B=12 / T=1000 exercise batch padding (->16) and tag padding (tn=1024, Tp=1024).
    B, D, T = 12, 128, 1000
    key = jax.random.PRNGKey(0)
    kx, kp = jax.random.split(key)
    features = jax.random.normal(kx, (B, D), jnp.float32)
    params = make_params(kp, D, T)

    out = refined_initial_emb_to_pred(features, params)
    out = jax.block_until_ready(out)

    ref = reference_jax(features, params)
    assert out.shape == (B, T)
    assert bool(jnp.allclose(out, ref, atol=2e-3, rtol=2e-3))
    print("KERNEL_OK")
</pallas_src>

<mosaic_0001>
module attributes {stable_mosaic.version = 11 : i64} {
  func.func @mlp_kernel(%arg0: i32, %arg1: memref<16x128xf32, #tpu.memory_space<vmem>>, %arg2: memref<128x256xbf16, #tpu.memory_space<vmem>>, %arg3: memref<1x256xf32, #tpu.memory_space<vmem>>, %arg4: memref<1x256xf32, #tpu.memory_space<vmem>>, %arg5: memref<1x256xf32, #tpu.memory_space<vmem>>, %arg6: memref<256x128xbf16, #tpu.memory_space<vmem>>, %arg7: memref<1x128xf32, #tpu.memory_space<vmem>>, %arg8: memref<1x128xf32, #tpu.memory_space<vmem>>, %arg9: memref<1x128xf32, #tpu.memory_space<vmem>>, %arg10: memref<16x128xbf16, #tpu.memory_space<vmem>>) attributes {dimension_semantics = [#tpu.dimension_semantics<parallel>], iteration_bounds = array<i64: 1>, scalar_prefetch = 0 : i64, scratch_operands = 0 : i64, tpu.core_type = #tpu.core_type<tc>, window_params = [{transform_indices = @transform_0, window_bounds = array<i64: 16, 128>}, {pipeline_mode = #tpu.pipeline_mode<synchronous>, transform_indices = @transform_1, window_bounds = array<i64: 128, 256>}, {pipeline_mode = #tpu.pipeline_mode<synchronous>, transform_indices = @transform_2, window_bounds = array<i64: 1, 256>}, {pipeline_mode = #tpu.pipeline_mode<synchronous>, transform_indices = @transform_3, window_bounds = array<i64: 1, 256>}, {pipeline_mode = #tpu.pipeline_mode<synchronous>, transform_indices = @transform_4, window_bounds = array<i64: 1, 256>}, {pipeline_mode = #tpu.pipeline_mode<synchronous>, transform_indices = @transform_5, window_bounds = array<i64: 256, 128>}, {pipeline_mode = #tpu.pipeline_mode<synchronous>, transform_indices = @transform_6, window_bounds = array<i64: 1, 128>}, {pipeline_mode = #tpu.pipeline_mode<synchronous>, transform_indices = @transform_7, window_bounds = array<i64: 1, 128>}, {pipeline_mode = #tpu.pipeline_mode<synchronous>, transform_indices = @transform_8, window_bounds = array<i64: 1, 128>}, {transform_indices = @transform_9, window_bounds = array<i64: 16, 128>}]} {
    %c0 = arith.constant 0 : index
    %c0_0 = arith.constant 0 : index
    %0 = vector.load %arg1[%c0, %c0_0] : memref<16x128xf32, #tpu.memory_space<vmem>>, vector<16x128xf32>
    %c0_1 = arith.constant 0 : index
    %c0_2 = arith.constant 0 : index
    %1 = vector.load %arg2[%c0_1, %c0_2] : memref<128x256xbf16, #tpu.memory_space<vmem>>, vector<128x256xbf16>
    %2 = arith.truncf %0 : vector<16x128xf32> to vector<16x128xbf16>
    %cst = arith.constant dense<0.000000e+00> : vector<16x256xf32>
    %3 = tpu.matmul %2, %1, %cst {dimension_numbers = #tpu.dot_dimension_numbers<[1], [0], [0], [1], [0, 0, 1, 1], [], []>} : vector<16x128xbf16>, vector<128x256xbf16>, vector<16x256xf32> -> vector<16x256xf32>
    %c0_3 = arith.constant 0 : index
    %c0_4 = arith.constant 0 : index
    %4 = vector.load %arg3[%c0_3, %c0_4] : memref<1x256xf32, #tpu.memory_space<vmem>>, vector<1x256xf32>
    %5 = vector.broadcast %4 : vector<1x256xf32> to vector<16x256xf32>
    %6 = arith.addf %3, %5 : vector<16x256xf32>
    %c0_5 = arith.constant 0 : index
    %c0_6 = arith.constant 0 : index
    %7 = vector.load %arg4[%c0_5, %c0_6] : memref<1x256xf32, #tpu.memory_space<vmem>>, vector<1x256xf32>
    %c0_7 = arith.constant 0 : index
    %c0_8 = arith.constant 0 : index
    %8 = vector.load %arg5[%c0_7, %c0_8] : memref<1x256xf32, #tpu.memory_space<vmem>>, vector<1x256xf32>
    %cst_9 = arith.constant dense<0.000000e+00> : vector<16xf32>
    %9 = vector.multi_reduction <add>, %6, %cst_9 [1] : vector<16x256xf32> to vector<16xf32>
    %10 = vector.shape_cast %9 : vector<16xf32> to vector<16x1xf32>
    %cst_10 = arith.constant 2.560000e+02 : f32
    %11 = vector.broadcast %cst_10 : f32 to vector<16x1xf32>
    %12 = arith.divf %10, %11 : vector<16x1xf32>
    %13 = vector.broadcast %12 : vector<16x1xf32> to vector<16x256xf32>
    %14 = arith.subf %6, %13 : vector<16x256xf32>
    %15 = arith.mulf %14, %14 : vector<16x256xf32>
    %cst_11 = arith.constant dense<0.000000e+00> : vector<16xf32>
    %16 = vector.multi_reduction <add>, %15, %cst_11 [1] : vector<16x256xf32> to vector<16xf32>
    %17 = vector.shape_cast %16 : vector<16xf32> to vector<16x1xf32>
    %cst_12 = arith.constant 2.560000e+02 : f32
    %18 = vector.broadcast %cst_12 : f32 to vector<16x1xf32>
    %19 = arith.divf %17, %18 : vector<16x1xf32>
    %20 = vector.broadcast %12 : vector<16x1xf32> to vector<16x256xf32>
    %21 = arith.subf %6, %20 : vector<16x256xf32>
    %cst_13 = arith.constant 9.99999974E-6 : f32
    %22 = vector.broadcast %cst_13 : f32 to vector<16x1xf32>
    %23 = arith.addf %19, %22 : vector<16x1xf32>
    %24 = math.rsqrt %23 : vector<16x1xf32>
    %25 = vector.broadcast %24 : vector<16x1xf32> to vector<16x256xf32>
    %26 = arith.mulf %21, %25 : vector<16x256xf32>
    %27 = vector.broadcast %7 : vector<1x256xf32> to vector<16x256xf32>
    %28 = arith.mulf %26, %27 : vector<16x256xf32>
    %29 = vector.broadcast %8 : vector<1x256xf32> to vector<16x256xf32>
    %30 = arith.addf %28, %29 : vector<16x256xf32>
    %cst_14 = arith.constant 5.000000e-01 : f32
    %31 = vector.broadcast %cst_14 : f32 to vector<16x256xf32>
    %32 = arith.mulf %31, %30 : vector<16x256xf32>
    %cst_15 = arith.constant 0.707106769 : f32
    %33 = vector.broadcast %cst_15 : f32 to vector<16x256xf32>
    %34 = arith.mulf %30, %33 : vector<16x256xf32>
    %35 = math.erf %34 : vector<16x256xf32>
    %cst_16 = arith.constant 1.000000e+00 : f32
    %36 = vector.broadcast %cst_16 : f32 to vector<16x256xf32>
    %37 = arith.addf %36, %35 : vector<16x256xf32>
    %38 = arith.mulf %32, %37 : vector<16x256xf32>
    %c0_17 = arith.constant 0 : index
    %c0_18 = arith.constant 0 : index
    %39 = vector.load %arg6[%c0_17, %c0_18] : memref<256x128xbf16, #tpu.memory_space<vmem>>, vector<256x128xbf16>
    %40 = arith.truncf %38 : vector<16x256xf32> to vector<16x256xbf16>
    %cst_19 = arith.constant dense<0.000000e+00> : vector<16x128xf32>
    %41 = tpu.matmul %40, %39, %cst_19 {dimension_numbers = #tpu.dot_dimension_numbers<[1], [0], [0], [1], [0, 0, 1, 1], [], []>} : vector<16x256xbf16>, vector<256x128xbf16>, vector<16x128xf32> -> vector<16x128xf32>
    %c0_20 = arith.constant 0 : index
    %c0_21 = arith.constant 0 : index
    %42 = vector.load %arg7[%c0_20, %c0_21] : memref<1x128xf32, #tpu.memory_space<vmem>>, vector<1x128xf32>
    %43 = vector.broadcast %42 : vector<1x128xf32> to vector<16x128xf32>
    %44 = arith.addf %41, %43 : vector<16x128xf32>
    %c0_22 = arith.constant 0 : index
    %c0_23 = arith.constant 0 : index
    %45 = vector.load %arg8[%c0_22, %c0_23] : memref<1x128xf32, #tpu.memory_space<vmem>>, vector<1x128xf32>
    %c0_24 = arith.constant 0 : index
    %c0_25 = arith.constant 0 : index
    %46 = vector.load %arg9[%c0_24, %c0_25] : memref<1x128xf32, #tpu.memory_space<vmem>>, vector<1x128xf32>
    %cst_26 = arith.constant dense<0.000000e+00> : vector<16xf32>
    %47 = vector.multi_reduction <add>, %44, %cst_26 [1] : vector<16x128xf32> to vector<16xf32>
    %48 = vector.shape_cast %47 : vector<16xf32> to vector<16x1xf32>
    %cst_27 = arith.constant 1.280000e+02 : f32
    %49 = vector.broadcast %cst_27 : f32 to vector<16x1xf32>
    %50 = arith.divf %48, %49 : vector<16x1xf32>
    %51 = vector.broadcast %50 : vector<16x1xf32> to vector<16x128xf32>
    %52 = arith.subf %44, %51 : vector<16x128xf32>
    %53 = arith.mulf %52, %52 : vector<16x128xf32>
    %cst_28 = arith.constant dense<0.000000e+00> : vector<16xf32>
    %54 = vector.multi_reduction <add>, %53, %cst_28 [1] : vector<16x128xf32> to vector<16xf32>
    %55 = vector.shape_cast %54 : vector<16xf32> to vector<16x1xf32>
    %cst_29 = arith.constant 1.280000e+02 : f32
    %56 = vector.broadcast %cst_29 : f32 to vector<16x1xf32>
    %57 = arith.divf %55, %56 : vector<16x1xf32>
    %58 = vector.broadcast %50 : vector<16x1xf32> to vector<16x128xf32>
    %59 = arith.subf %44, %58 : vector<16x128xf32>
    %cst_30 = arith.constant 9.99999974E-6 : f32
    %60 = vector.broadcast %cst_30 : f32 to vector<16x1xf32>
    %61 = arith.addf %57, %60 : vector<16x1xf32>
    %62 = math.rsqrt %61 : vector<16x1xf32>
    %63 = vector.broadcast %62 : vector<16x1xf32> to vector<16x128xf32>
    %64 = arith.mulf %59, %63 : vector<16x128xf32>
    %65 = vector.broadcast %45 : vector<1x128xf32> to vector<16x128xf32>
    %66 = arith.mulf %64, %65 : vector<16x128xf32>
    %67 = vector.broadcast %46 : vector<1x128xf32> to vector<16x128xf32>
    %68 = arith.addf %66, %67 : vector<16x128xf32>
    %cst_31 = arith.constant 5.000000e-01 : f32
    %69 = vector.broadcast %cst_31 : f32 to vector<16x128xf32>
    %70 = arith.mulf %69, %68 : vector<16x128xf32>
    %cst_32 = arith.constant 0.707106769 : f32
    %71 = vector.broadcast %cst_32 : f32 to vector<16x128xf32>
    %72 = arith.mulf %68, %71 : vector<16x128xf32>
    %73 = math.erf %72 : vector<16x128xf32>
    %cst_33 = arith.constant 1.000000e+00 : f32
    %74 = vector.broadcast %cst_33 : f32 to vector<16x128xf32>
    %75 = arith.addf %74, %73 : vector<16x128xf32>
    %76 = arith.mulf %70, %75 : vector<16x128xf32>
    %77 = arith.truncf %76 : vector<16x128xf32> to vector<16x128xbf16>
    %c0_34 = arith.constant 0 : index
    %c0_35 = arith.constant 0 : index
    %78 = vector.load %arg10[%c0_34, %c0_35] : memref<16x128xbf16, #tpu.memory_space<vmem>>, vector<16x128xbf16>
    tpu.vector_store %arg10[%c0_34, %c0_35], %77 {strides = array<i32>} : memref<16x128xbf16, #tpu.memory_space<vmem>>, vector<16x128xbf16>,
    return
  }
  func.func @transform_0(%arg0: i32) -> (i32, i32) {
    %c0_i32 = arith.constant 0 : i32
    %c0_i32_0 = arith.constant 0 : i32
    return %arg0, %c0_i32 : i32, i32
  }
  func.func @transform_1(%arg0: i32) -> (i32, i32) {
    %c0_i32 = arith.constant 0 : i32
    %c0_i32_0 = arith.constant 0 : i32
    %c0_i32_1 = arith.constant 0 : i32
    return %c0_i32, %c0_i32_0 : i32, i32
  }
  func.func @transform_2(%arg0: i32) -> (i32, i32) {
    %c0_i32 = arith.constant 0 : i32
    %c0_i32_0 = arith.constant 0 : i32
    %c0_i32_1 = arith.constant 0 : i32
    return %c0_i32, %c0_i32_0 : i32, i32
  }
  func.func @transform_3(%arg0: i32) -> (i32, i32) {
    %c0_i32 = arith.constant 0 : i32
    %c0_i32_0 = arith.constant 0 : i32
    %c0_i32_1 = arith.constant 0 : i32
    return %c0_i32, %c0_i32_0 : i32, i32
  }
  func.func @transform_4(%arg0: i32) -> (i32, i32) {
    %c0_i32 = arith.constant 0 : i32
    %c0_i32_0 = arith.constant 0 : i32
    %c0_i32_1 = arith.constant 0 : i32
    return %c0_i32, %c0_i32_0 : i32, i32
  }
  func.func @transform_5(%arg0: i32) -> (i32, i32) {
    %c0_i32 = arith.constant 0 : i32
    %c0_i32_0 = arith.constant 0 : i32
    %c0_i32_1 = arith.constant 0 : i32
    return %c0_i32, %c0_i32_0 : i32, i32
  }
  func.func @transform_6(%arg0: i32) -> (i32, i32) {
    %c0_i32 = arith.constant 0 : i32
    %c0_i32_0 = arith.constant 0 : i32
    %c0_i32_1 = arith.constant 0 : i32
    return %c0_i32, %c0_i32_0 : i32, i32
  }
  func.func @transform_7(%arg0: i32) -> (i32, i32) {
    %c0_i32 = arith.constant 0 : i32
    %c0_i32_0 = arith.constant 0 : i32
    %c0_i32_1 = arith.constant 0 : i32
    return %c0_i32, %c0_i32_0 : i32, i32
  }
  func.func @transform_8(%arg0: i32) -> (i32, i32) {
    %c0_i32 = arith.constant 0 : i32
    %c0_i32_0 = arith.constant 0 : i32
    %c0_i32_1 = arith.constant 0 : i32
    return %c0_i32, %c0_i32_0 : i32, i32
  }
  func.func @transform_9(%arg0: i32) -> (i32, i32) {
    %c0_i32 = arith.constant 0 : i32
    %c0_i32_0 = arith.constant 0 : i32
    return %arg0, %c0_i32 : i32, i32
  }
}

</mosaic_0001>

<llo_original>
// kernel: tpu_custom_call.1
$region0: #{tpu_custom_call.1}
  #allocation0 [shape = 'u32[]', space=smem, size = 0x4, offset = 0x4, fixed_abs, tag = 'smem constant byte address 0x4 - core index']
  #allocation1 [shape = 'u32[144,128]{1,0:T(1,128)}', space=vmem, size = 0x12000, scoped, tag = 'internal scratch']
  %s0 = inlined_call_operand.hbm [shape: f32[16,128], index: 0, kind: input, shape index: {}]
  %s1 = inlined_call_operand.hbm [shape: bf16[128,256], index: 1, kind: input, shape index: {}]
  %s2 = inlined_call_operand.vmem [shape: f32[1,256], index: 2, kind: input, shape index: {}]
  %s3 = inlined_call_operand.vmem [shape: f32[1,256], index: 3, kind: input, shape index: {}]
  %s4 = inlined_call_operand.vmem [shape: f32[1,256], index: 4, kind: input, shape index: {}]
  %s5 = inlined_call_operand.hbm [shape: bf16[256,128], index: 5, kind: input, shape index: {}]
  %s6 = inlined_call_operand.vmem [shape: f32[1,128], index: 6, kind: input, shape index: {}]
  %s7 = inlined_call_operand.vmem [shape: f32[1,128], index: 7, kind: input, shape index: {}]
  %s8 = inlined_call_operand.vmem [shape: f32[1,128], index: 8, kind: input, shape index: {}]
  %s9 = inlined_call_operand.hbm [shape: bf16[16,128], index: 9, kind: output, shape index: {}]
  %s10 = sld [smem:[#allocation0]]
  $region58: #{tpu_custom_call.1} parent=0
    _
  %s12 = ssub.s32 1, %s10
  %s13 = scalar_select 0, %s12, %s10
  $region1: #{tpu_custom_call.1} parent=0
    #allocation2 [shape = 'u8[8192]{0}', space=vmem, size = 0x2000, scoped, tag = 'input window, operand 0, single buffered']
    #allocation3 [shape = 's32[1]{0}', space=sflag, size = 0x4, scoped, tag = 'scoped memory for tpu_custom_call.1']
    #allocation4 [shape = 's32[1]{0}', space=sflag, size = 0x4, scoped, tag = 'scoped memory for tpu_custom_call.1']
    #allocation5 [shape = 'u8[65536]{0}', space=vmem, size = 0x10000, scoped, tag = 'input window, operand 1, single buffered']
    #allocation6 [shape = 's32[1]{0}', space=sflag, size = 0x4, scoped, tag = 'scoped memory for tpu_custom_call.1']
    #allocation7 [shape = 'u8[65536]{0}', space=vmem, size = 0x10000, scoped, tag = 'input window, operand 5, single buffered']
    #allocation8 [shape = 'u8[4096]{0}', space=vmem, size = 0x1000, scoped, tag = 'output window, operand 0, single buffered']
    %14 = vsyncpa [#allocation3], 0
    %15 = vsyncpa [#allocation6], 0
    %16 = vsyncpa [#allocation4], 0
    // Predicated region
    $region2: #{tpu_custom_call.1} parent=1 // pred_check
      _
    $region3: #{tpu_custom_call.1} parent=1 // pred_check_branch
      %18 = sbr.rel (0) target = $region5
    $region4: #{tpu_custom_call.1} parent=1 // pred_region
      %s20 = ssub.s32 256, 256
      %21 = vsyncadd [#allocation3], %s20
      %s22 = sshll.u32 [#allocation2], 4
      %s23 = int_to_ptr.vmem [resolvable:$true] %s22
      %28 = dma.hbm_to_vmem [thread:$0]  %s0, 256, %s23, [#allocation3], 128, 128, 8
    $region5: #{tpu_custom_call.1} parent=1 // pred_fallthru
      _
    // Predicated region
    $region6: #{tpu_custom_call.1} parent=1 // pred_check
      _
    $region7: #{tpu_custom_call.1} parent=1 // pred_check_branch
      %30 = sbr.rel (0) target = $region9
    $region8: #{tpu_custom_call.1} parent=1 // pred_region
      %s32 = ssub.s32 2048, 2048
      %33 = vsyncadd [#allocation6], %s32
      %s34 = sshll.u32 [#allocation5], 4
      %s35 = int_to_ptr.vmem [resolvable:$true] %s34
      %40 = dma.hbm_to_vmem [thread:$0]  %s1, 2048, %s35, [#allocation6], 128, 128, 8
    $region9: #{tpu_custom_call.1} parent=1 // pred_fallthru
      _
    // Predicated region
    $region10: #{tpu_custom_call.1} parent=1 // pred_check
      _
    $region11: #{tpu_custom_call.1} parent=1 // pred_check_branch
      %42 = sbr.rel (0) target = $region13
    $region12: #{tpu_custom_call.1} parent=1 // pred_region
      _
    $region13: #{tpu_custom_call.1} parent=1 // pred_fallthru
      _
    // Predicated region
    $region14: #{tpu_custom_call.1} parent=1 // pred_check
      _
    $region15: #{tpu_custom_call.1} parent=1 // pred_check_branch
      %44 = sbr.rel (0) target = $region17
    $region16: #{tpu_custom_call.1} parent=1 // pred_region
      _
    $region17: #{tpu_custom_call.1} parent=1 // pred_fallthru
      _
    // Predicated region
    $region18: #{tpu_custom_call.1} parent=1 // pred_check
      _
    $region19: #{tpu_custom_call.1} parent=1 // pred_check_branch
      %46 = sbr.rel (0) target = $region21
    $region20: #{tpu_custom_call.1} parent=1 // pred_region
      _
    $region21: #{tpu_custom_call.1} parent=1 // pred_fallthru
      _
    // Predicated region
    $region22: #{tpu_custom_call.1} parent=1 // pred_check
      _
    $region23: #{tpu_custom_call.1} parent=1 // pred_check_branch
      %48 = sbr.rel (0) target = $region25
    $region24: #{tpu_custom_call.1} parent=1 // pred_region
      %s50 = ssub.s32 2048, 2048
      %51 = vsyncadd [#allocation6], %s50
      %s52 = sshll.u32 [#allocation7], 4
      %s53 = int_to_ptr.vmem [resolvable:$true] %s52
      %58 = dma.hbm_to_vmem [thread:$0]  %s5, 2048, %s53, [#allocation6], 64, 64, 4
    $region25: #{tpu_custom_call.1} parent=1 // pred_fallthru
      _
    // Predicated region
    $region26: #{tpu_custom_call.1} parent=1 // pred_check
      _
    $region27: #{tpu_custom_call.1} parent=1 // pred_check_branch
      %60 = sbr.rel (0) target = $region29
    $region28: #{tpu_custom_call.1} parent=1 // pred_region
      _
    $region29: #{tpu_custom_call.1} parent=1 // pred_fallthru
      _
    // Predicated region
    $region30: #{tpu_custom_call.1} parent=1 // pred_check
      _
    $region31: #{tpu_custom_call.1} parent=1 // pred_check_branch
      %62 = sbr.rel (0) target = $region33
    $region32: #{tpu_custom_call.1} parent=1 // pred_region
      _
    $region33: #{tpu_custom_call.1} parent=1 // pred_fallthru
      _
    // Predicated region
    $region34: #{tpu_custom_call.1} parent=1 // pred_check
      _
    $region35: #{tpu_custom_call.1} parent=1 // pred_check_branch
      %64 = sbr.rel (0) target = $region37
    $region36: #{tpu_custom_call.1} parent=1 // pred_region
      _
    $region37: #{tpu_custom_call.1} parent=1 // pred_fallthru
      _
    // Predicated region
    $region38: #{tpu_custom_call.1} parent=1 // pred_check
      _
    $region39: #{tpu_custom_call.1} parent=1 // pred_check_branch
      %66 = sbr.rel (0) target = $region41
    $region40: #{tpu_custom_call.1} parent=1 // pred_region
      %67 = dma.done [#allocation3], 256
    $region41: #{tpu_custom_call.1} parent=1 // pred_fallthru
      _
    // Predicated region
    $region42: #{tpu_custom_call.1} parent=1 // pred_check
      _
    $region43: #{tpu_custom_call.1} parent=1 // pred_check_branch
      %69 = sbr.rel (0) target = $region45
    $region44: #{tpu_custom_call.1} parent=1 // pred_region
      %70 = dma.done [#allocation6], 2048
    $region45: #{tpu_custom_call.1} parent=1 // pred_fallthru
      _
    // Predicated region
    $region46: #{tpu_custom_call.1} parent=1 // pred_check
      _
    $region47: #{tpu_custom_call.1} parent=1 // pred_check_branch
      %72 = sbr.rel (0) target = $region49
    $region48: #{tpu_custom_call.1} parent=1 // pred_region
      %73 = dma.done [#allocation6], 2048
    $region49: #{tpu_custom_call.1} parent=1 // pred_fallthru
      _
    %v75 = vld [vmem:[#allocation2] sm:$0xff]
    %v76 = vld [vmem:[#allocation2 + $0x8] sm:$0xff]
    %v77 = vld [vmem:[#allocation5] sm:$0xff]
    %v78 = vld [vmem:[#allocation5 + $0x8] sm:$0xff]
    %v79 = vld [vmem:[#allocation5 + $0x10] sm:$0xff]
    %v80 = vld [vmem:[#allocation5 + $0x18] sm:$0xff]
    %v81 = vld [vmem:[#allocation5 + $0x20] sm:$0xff]
    %v82 = vld [vmem:[#allocation5 + $0x28] sm:$0xff]
    %v83 = vld [vmem:[#allocation5 + $0x30] sm:$0xff]
    %v84 = vld [vmem:[#allocation5 + $0x38] sm:$0xff]
    %v85 = vld [vmem:[#allocation5 + $0x40] sm:$0xff]
    %v86 = vld [vmem:[#allocation5 + $0x48] sm:$0xff]
    %v87 = vld [vmem:[#allocation5 + $0x50] sm:$0xff]
    %v88 = vld [vmem:[#allocation5 + $0x58] sm:$0xff]
    %v89 = vld [vmem:[#allocation5 + $0x60] sm:$0xff]
    %v90 = vld [vmem:[#allocation5 + $0x68] sm:$0xff]
    %v91 = vld [vmem:[#allocation5 + $0x70] sm:$0xff]
    %v92 = vld [vmem:[#allocation5 + $0x78] sm:$0xff]
    %v93 = vpack.c.bf16 %v76, %v75
    %v94 = vld [vmem:[%s2] sm:$0x3]
    %v96 = vlaneseq
    %v97 = vshrl.u32 %v96, 7
    %v98 = vsub.s32 0, %v97
    %v99 = vrot.slane %v94, %v98
    %v100 = vlaneseq
    %v101 = vshrl.u32 %v100, 7
    %v102 = vsub.s32 1, %v101
    %v103 = vrot.slane %v94, %v102
    %v122 = vunpack.c.l.b16 %v77
    %v123 = vunpack.c.h.b16 %v77
    %v124 = vunpack.c.l.b16 %v78
    %v125 = vunpack.c.h.b16 %v78
    %v126 = vunpack.c.l.b16 %v79
    %v127 = vunpack.c.h.b16 %v79
    %v128 = vunpack.c.l.b16 %v80
    %v129 = vunpack.c.h.b16 %v80
    %v130 = vunpack.c.l.b16 %v81
    %v131 = vunpack.c.h.b16 %v81
    %v132 = vunpack.c.l.b16 %v82
    %v133 = vunpack.c.h.b16 %v82
    %v134 = vunpack.c.l.b16 %v83
    %v135 = vunpack.c.h.b16 %v83
    %v136 = vunpack.c.l.b16 %v84
    %v137 = vunpack.c.h.b16 %v84
    %v138 = vunpack.c.l.b16 %v85
    %v139 = vunpack.c.h.b16 %v85
    %v140 = vunpack.c.l.b16 %v86
    %v141 = vunpack.c.h.b16 %v86
    %v142 = vunpack.c.l.b16 %v87
    %v143 = vunpack.c.h.b16 %v87
    %v144 = vunpack.c.l.b16 %v88
    %v145 = vunpack.c.h.b16 %v88
    %v146 = vunpack.c.l.b16 %v89
    %v147 = vunpack.c.h.b16 %v89
    %v148 = vunpack.c.l.b16 %v90
    %v149 = vunpack.c.h.b16 %v90
    %v150 = vunpack.c.l.b16 %v91
    %v151 = vunpack.c.h.b16 %v91
    %v152 = vunpack.c.l.b16 %v92
    %v153 = vunpack.c.h.b16 %v92
    %v154 = vpack.c.b16 %v124, %v122
    %v155 = vpack.c.b16 %v125, %v123
    %v156 = vpack.c.b16 %v128, %v126
    %v157 = vpack.c.b16 %v129, %v127
    %v158 = vpack.c.b16 %v132, %v130
    %v159 = vpack.c.b16 %v133, %v131
    %v160 = vpack.c.b16 %v136, %v134
    %v161 = vpack.c.b16 %v137, %v135
    %v162 = vpack.c.b16 %v140, %v138
    %v163 = vpack.c.b16 %v141, %v139
    %v164 = vpack.c.b16 %v144, %v142
    %v165 = vpack.c.b16 %v145, %v143
    %v166 = vpack.c.b16 %v148, %v146
    %v167 = vpack.c.b16 %v149, %v147
    %v168 = vpack.c.b16 %v152, %v150
    %v169 = vpack.c.b16 %v153, %v151
    %186 = vmatprep.subr.bf16.mxu0 %v155
    %187 = vmatpush1.bf16.msra.mxu0 %v154
    %188 = vmatprep.subr.bf16.mxu0 %v157
    %189 = vmatpush1.bf16.msra.mxu0 %v156
    %190 = vmatprep.subr.bf16.mxu0 %v159
    %191 = vmatpush1.bf16.msra.mxu0 %v158
    %192 = vmatprep.subr.bf16.mxu0 %v161
    %193 = vmatpush1.bf16.msra.mxu0 %v160
    %194 = vmatprep.subr.bf16.mxu0 %v163
    %195 = vmatpush1.bf16.msra.mxu0 %v162
    %196 = vmatprep.subr.bf16.mxu0 %v165
    %197 = vmatpush1.bf16.msra.mxu0 %v164
    %198 = vmatprep.subr.bf16.mxu0 %v167
    %199 = vmatpush1.bf16.msra.mxu0 %v166
    %200 = vmatprep.subr.bf16.mxu0 %v169
    %201 = vmatpush1.bf16.msra.mxu0 %v168
    %202 = vmatprep.subr.bf16.mxu0 0
    %203 = vmatpush1.bf16.msra.mxu0 0
    %204 = vmatprep.subr.bf16.mxu0 0
    %205 = vmatpush1.bf16.msra.mxu0 0
    %206 = vmatprep.subr.bf16.mxu0 0
    %207 = vmatpush1.bf16.msra.mxu0 0
    %208 = vmatprep.subr.bf16.mxu0 0
    %209 = vmatpush1.bf16.msra.mxu0 0
    %210 = vmatprep.subr.bf16.mxu0 0
    %211 = vmatpush1.bf16.msra.mxu0 0
    %212 = vmatprep.subr.bf16.mxu0 0
    %213 = vmatpush1.bf16.msra.mxu0 0
    %214 = vmatprep.subr.bf16.mxu0 0
    %215 = vmatpush1.bf16.msra.mxu0 0
    %216 = vmatprep.subr.bf16.mxu0 0
    %217 = vmatpush1.bf16.msra.mxu0 0
    %218 = vmatprep.mubr.bf16.mxu0 0
    %219 = vmatmul.mubr.bf16.gmra.mrb[0].mxu0 %v93
    %v220 = vpop.f32.mrb[0].mxu0
    %v221 = vadd.f32 %v99, %v220
    %v222 = vpop.f32.mrb[0].mxu0
    %v223 = vadd.f32 %v103, %v222
    %v224 = vpop.f32.mrb[0].mxu0
    %v225 = vadd.f32 %v99, %v224
    %v226 = vpop.f32.mrb[0].mxu0
    %v227 = vadd.f32 %v103, %v226
    %228 = vdwg.mxu0
    %v229 = vld [vmem:[%s3] sm:$0x3]
    %v230 = vld [vmem:[%s4] sm:$0x3]
    %v231 = vadd.f32 %v221, %v223
    %232 = vadd.xlane.f32.xlu0 %v231
    %v233 = vpop.xlane.xlu0 %232
    %v234 = vadd.f32 %v225, %v227
    %235 = vadd.xlane.f32.xlu0 %v234
    %v236 = vpop.xlane.xlu0 %235
    %v237 = vrcp.pop 256.0
    %v238 = vmul.f32 %v233, %v237
    %v239 = vmul.f32 %v236, %v237
    %v240 = vsub.f32 %v221, %v238
    %v241 = vsub.f32 %v223, %v238
    %v242 = vsub.f32 %v225, %v239
    %v243 = vsub.f32 %v227, %v239
    %v244 = vmul.f32 %v240, %v240
    %v245 = vmul.f32 %v241, %v241
    %v246 = vmul.f32 %v242, %v242
    %v247 = vmul.f32 %v243, %v243
    %v248 = vadd.f32 %v244, %v245
    %249 = vadd.xlane.f32.xlu0 %v248
    %v250 = vpop.xlane.xlu0 %249
    %v251 = vadd.f32 %v246, %v247
    %252 = vadd.xlane.f32.xlu0 %v251
    %v253 = vpop.xlane.xlu0 %252
    %v254 = vmul.f32 %v250, %v237
    %v255 = vmul.f32 %v253, %v237
    %v256 = vadd.f32 %v254, 1e-05
    %v257 = vadd.f32 %v255, 1e-05
    %v258 = vrsqrt.pop %v256
    %v259 = vrsqrt.pop %v257
    %v260 = vmul.f32 %v240, %v258
    %v261 = vmul.f32 %v241, %v258
    %v262 = vmul.f32 %v242, %v259
    %v263 = vmul.f32 %v243, %v259
    %v265 = vlaneseq
    %v266 = vshrl.u32 %v265, 7
    %v267 = vsub.s32 0, %v266
    %v268 = vrot.slane %v229, %v267
    %v269 = vlaneseq
    %v270 = vshrl.u32 %v269, 7
    %v271 = vsub.s32 1, %v270
    %v272 = vrot.slane %v229, %v271
    %v275 = vmul.f32 %v260, %v268
    %v276 = vmul.f32 %v261, %v272
    %v277 = vmul.f32 %v262, %v268
    %v278 = vmul.f32 %v263, %v272
    %v280 = vlaneseq
    %v281 = vshrl.u32 %v280, 7
    %v282 = vsub.s32 0, %v281
    %v283 = vrot.slane %v230, %v282
    %v284 = vlaneseq
    %v285 = vshrl.u32 %v284, 7
    %v286 = vsub.s32 1, %v285
    %v287 = vrot.slane %v230, %v286
    %v290 = vadd.f32 %v275, %v283
    %v291 = vadd.f32 %v276, %v287
    %v292 = vadd.f32 %v277, %v283
    %v293 = vadd.f32 %v278, %v287
    %v294 = vmul.f32 %v290, 0.5
    %v295 = vmul.f32 %v291, 0.5
    %v296 = vmul.f32 %v292, 0.5
    %v297 = vmul.f32 %v293, 0.5
    %v298 = vmul.f32 %v290, 0.70710677
    %v299 = vmul.f32 %v291, 0.70710677
    %v300 = vmul.f32 %v292, 0.70710677
    %v301 = vmul.f32 %v293, 0.70710677
    %v302 = verf.f32.pop %v298
    %v303 = verf.f32.pop %v299
    %v304 = verf.f32.pop %v300
    %v305 = verf.f32.pop %v301
    %v306 = vadd.f32 %v302, 1.0
    %v307 = vadd.f32 %v303, 1.0
    %v308 = vadd.f32 %v304, 1.0
    %v309 = vadd.f32 %v305, 1.0
    %v310 = vmul.f32 %v294, %v306
    %v311 = vmul.f32 %v295, %v307
    %v312 = vmul.f32 %v296, %v308
    %v313 = vmul.f32 %v297, %v309
    %v314 = vld [vmem:[#allocation7] sm:$0xf]
    %v315 = vld [vmem:[#allocation7 + $0x4] sm:$0xf]
    %v316 = vld [vmem:[#allocation7 + $0x8] sm:$0xf]
    %v317 = vld [vmem:[#allocation7 + $0xc] sm:$0xf]
    %v318 = vld [vmem:[#allocation7 + $0x10] sm:$0xf]
    %v319 = vld [vmem:[#allocation7 + $0x14] sm:$0xf]
    %v320 = vld [vmem:[#allocation7 + $0x18] sm:$0xf]
    %v321 = vld [vmem:[#allocation7 + $0x1c] sm:$0xf]
    %v322 = vld [vmem:[#allocation7 + $0x20] sm:$0xf]
    %v323 = vld [vmem:[#allocation7 + $0x24] sm:$0xf]
    %v324 = vld [vmem:[#allocation7 + $0x28] sm:$0xf]
    %v325 = vld [vmem:[#allocation7 + $0x2c] sm:$0xf]
    %v326 = vld [vmem:[#allocation7 + $0x30] sm:$0xf]
    %v327 = vld [vmem:[#allocation7 + $0x34] sm:$0xf]
    %v328 = vld [vmem:[#allocation7 + $0x38] sm:$0xf]
    %v329 = vld [vmem:[#allocation7 + $0x3c] sm:$0xf]
    %v330 = vld [vmem:[#allocation7 + $0x40] sm:$0xf]
    %v331 = vld [vmem:[#allocation7 + $0x44] sm:$0xf]
    %v332 = vld [vmem:[#allocation7 + $0x48] sm:$0xf]
    %v333 = vld [vmem:[#allocation7 + $0x4c] sm:$0xf]
    %v334 = vld [vmem:[#allocation7 + $0x50] sm:$0xf]
    %v335 = vld [vmem:[#allocation7 + $0x54] sm:$0xf]
    %v336 = vld [vmem:[#allocation7 + $0x58] sm:$0xf]
    %v337 = vld [vmem:[#allocation7 + $0x5c] sm:$0xf]
    %v338 = vld [vmem:[#allocation7 + $0x60] sm:$0xf]
    %v339 = vld [vmem:[#allocation7 + $0x64] sm:$0xf]
    %v340 = vld [vmem:[#allocation7 + $0x68] sm:$0xf]
    %v341 = vld [vmem:[#allocation7 + $0x6c] sm:$0xf]
    %v342 = vld [vmem:[#allocation7 + $0x70] sm:$0xf]
    %v343 = vld [vmem:[#allocation7 + $0x74] sm:$0xf]
    %v344 = vld [vmem:[#allocation7 + $0x78] sm:$0xf]
    %v345 = vld [vmem:[#allocation7 + $0x7c] sm:$0xf]
    %v346 = vpack.c.bf16 %v312, %v310
    %v347 = vpack.c.bf16 %v313, %v311
    %v348 = vld [vmem:[%s6] sm:$0x1]
    %v350 = vlaneseq
    %v351 = vshrl.u32 %v350, 7
    %v352 = vsub.s32 0, %v351
    %v353 = vrot.slane %v348, %v352
    %v387 = vunpack.c.l.b16 %v314
    %v388 = vunpack.c.l.b16 %v315
    %v389 = vunpack.c.l.b16 %v316
    %v390 = vunpack.c.l.b16 %v317
    %v391 = vunpack.c.l.b16 %v318
    %v392 = vunpack.c.l.b16 %v319
    %v393 = vunpack.c.l.b16 %v320
    %v394 = vunpack.c.l.b16 %v321
    %v395 = vunpack.c.l.b16 %v322
    %v396 = vunpack.c.l.b16 %v323
    %v397 = vunpack.c.l.b16 %v324
    %v398 = vunpack.c.l.b16 %v325
    %v399 = vunpack.c.l.b16 %v326
    %v400 = vunpack.c.l.b16 %v327
    %v401 = vunpack.c.l.b16 %v328
    %v402 = vunpack.c.l.b16 %v329
    %v403 = vunpack.c.l.b16 %v330
    %v404 = vunpack.c.l.b16 %v331
    %v405 = vunpack.c.l.b16 %v332
    %v406 = vunpack.c.l.b16 %v333
    %v407 = vunpack.c.l.b16 %v334
    %v408 = vunpack.c.l.b16 %v335
    %v409 = vunpack.c.l.b16 %v336
    %v410 = vunpack.c.l.b16 %v337
    %v411 = vunpack.c.l.b16 %v338
    %v412 = vunpack.c.l.b16 %v339
    %v413 = vunpack.c.l.b16 %v340
    %v414 = vunpack.c.l.b16 %v341
    %v415 = vunpack.c.l.b16 %v342
    %v416 = vunpack.c.l.b16 %v343
    %v417 = vunpack.c.l.b16 %v344
    %v418 = vunpack.c.l.b16 %v345
    %v419 = vpack.c.b16 %v388, %v387
    %v420 = vpack.c.b16 %v390, %v389
    %v421 = vpack.c.b16 %v392, %v391
    %v422 = vpack.c.b16 %v394, %v393
    %v423 = vpack.c.b16 %v396, %v395
    %v424 = vpack.c.b16 %v398, %v397
    %v425 = vpack.c.b16 %v400, %v399
    %v426 = vpack.c.b16 %v402, %v401
    %v427 = vpack.c.b16 %v404, %v403
    %v428 = vpack.c.b16 %v406, %v405
    %v429 = vpack.c.b16 %v408, %v407
    %v430 = vpack.c.b16 %v410, %v409
    %v431 = vpack.c.b16 %v412, %v411
    %v432 = vpack.c.b16 %v414, %v413
    %v433 = vpack.c.b16 %v416, %v415
    %v434 = vpack.c.b16 %v418, %v417
    %451 = vmatprep.subr.bf16.mxu0 0
    %452 = vmatpush1.bf16.msra.mxu0 %v419
    %453 = vmatprep.subr.bf16.mxu0 0
    %454 = vmatpush1.bf16.msra.mxu0 %v420
    %455 = vmatprep.subr.bf16.mxu0 0
    %456 = vmatpush1.bf16.msra.mxu0 %v421
    %457 = vmatprep.subr.bf16.mxu0 0
    %458 = vmatpush1.bf16.msra.mxu0 %v422
    %459 = vmatprep.subr.bf16.mxu0 0
    %460 = vmatpush1.bf16.msra.mxu0 %v423
    %461 = vmatprep.subr.bf16.mxu0 0
    %462 = vmatpush1.bf16.msra.mxu0 %v424
    %463 = vmatprep.subr.bf16.mxu0 0
    %464 = vmatpush1.bf16.msra.mxu0 %v425
    %465 = vmatprep.subr.bf16.mxu0 0
    %466 = vmatpush1.bf16.msra.mxu0 %v426
    %467 = vmatprep.subr.bf16.mxu0 0
    %468 = vmatpush1.bf16.msra.mxu0 %v427
    %469 = vmatprep.subr.bf16.mxu0 0
    %470 = vmatpush1.bf16.msra.mxu0 %v428
    %471 = vmatprep.subr.bf16.mxu0 0
    %472 = vmatpush1.bf16.msra.mxu0 %v429
    %473 = vmatprep.subr.bf16.mxu0 0
    %474 = vmatpush1.bf16.msra.mxu0 %v430
    %475 = vmatprep.subr.bf16.mxu0 0
    %476 = vmatpush1.bf16.msra.mxu0 %v431
    %477 = vmatprep.subr.bf16.mxu0 0
    %478 = vmatpush1.bf16.msra.mxu0 %v432
    %479 = vmatprep.subr.bf16.mxu0 0
    %480 = vmatpush1.bf16.msra.mxu0 %v433
    %481 = vmatprep.subr.bf16.mxu0 0
    %482 = vmatpush1.bf16.msra.mxu0 %v434
    %483 = vmatprep.mubr.bf16.mxu0 %v347
    %484 = vmatmul.mubr.bf16.gmra.mrb[0].mxu0 %v346
    %v485 = vpop.f32.mrb[0].mxu0
    %v486 = vadd.f32 %v353, %v485
    %v487 = vpop.f32.mrb[0].mxu0
    %v488 = vpop.f32.mrb[0].mxu0
    %v489 = vadd.f32 %v353, %v488
    %v490 = vpop.f32.mrb[0].mxu0
    %491 = vdwg.mxu0
    %v492 = vld [vmem:[%s7] sm:$0x1]
    %v493 = vld [vmem:[%s8] sm:$0x1]
    %494 = vadd.xlane.f32.xlu0 %v486
    %v495 = vpop.xlane.xlu0 %494
    %496 = vadd.xlane.f32.xlu0 %v489
    %v497 = vpop.xlane.xlu0 %496
    %v498 = vrcp.pop 128.0
    %v499 = vmul.f32 %v495, %v498
    %v500 = vmul.f32 %v497, %v498
    %v501 = vsub.f32 %v486, %v499
    %v502 = vsub.f32 %v489, %v500
    %v503 = vmul.f32 %v501, %v501
    %v504 = vmul.f32 %v502, %v502
    %505 = vadd.xlane.f32.xlu0 %v503
    %v506 = vpop.xlane.xlu0 %505
    %507 = vadd.xlane.f32.xlu0 %v504
    %v508 = vpop.xlane.xlu0 %507
    %v509 = vmul.f32 %v506, %v498
    %v510 = vmul.f32 %v508, %v498
    %v511 = vadd.f32 %v509, 1e-05
    %v512 = vadd.f32 %v510, 1e-05
    %v513 = vrsqrt.pop %v511
    %v514 = vrsqrt.pop %v512
    %v515 = vmul.f32 %v501, %v513
    %v516 = vmul.f32 %v502, %v514
    %v518 = vlaneseq
    %v519 = vshrl.u32 %v518, 7
    %v520 = vsub.s32 0, %v519
    %v521 = vrot.slane %v492, %v520
    %v523 = vmul.f32 %v515, %v521
    %v524 = vmul.f32 %v516, %v521
    %v526 = vlaneseq
    %v527 = vshrl.u32 %v526, 7
    %v528 = vsub.s32 0, %v527
    %v529 = vrot.slane %v493, %v528
    %v531 = vadd.f32 %v523, %v529
    %v532 = vadd.f32 %v524, %v529
    %v533 = vmul.f32 %v531, 0.5
    %v534 = vmul.f32 %v532, 0.5
    %v535 = vmul.f32 %v531, 0.70710677
    %v536 = vmul.f32 %v532, 0.70710677
    %v537 = verf.f32.pop %v535
    %v538 = verf.f32.pop %v536
    %v539 = vadd.f32 %v537, 1.0
    %v540 = vadd.f32 %v538, 1.0
    %v541 = vmul.f32 %v533, %v539
    %v542 = vmul.f32 %v534, %v540
    %v543 = vpack.c.bf16 %v542, %v541
    %v545 = vunpack.c.l.b16 %v543
    %v546 = vunpack.c.h.b16 %v543
    %v547 = vpack.c.b16 %v545, %v545
    %v548 = vpack.c.b16 %v546, %v546
    %551 = vst [vmem:[#allocation8] sm:$0xf] %v547
    %552 = vst [vmem:[#allocation8 + $0x4] sm:$0xf] %v548
    // Predicated region
    $region50: #{tpu_custom_call.1} parent=1 // pred_check
      _
    $region51: #{tpu_custom_call.1} parent=1 // pred_check_branch
      %554 = sbr.rel (0) target = $region53
    $region52: #{tpu_custom_call.1} parent=1 // pred_region
      %s556 = ssub.s32 128, 128
      %557 = vsyncadd [#allocation4], %s556
      %s558 = sshll.u32 [#allocation8], 4
      %s559 = int_to_ptr.vmem [resolvable:$true] %s558
      %564 = dma.vmem_to_hbm [thread:$0]  %s559, 128, %s9, [#allocation4], 64, 64, 4
    $region53: #{tpu_custom_call.1} parent=1 // pred_fallthru
      _
    // Predicated region
    $region54: #{tpu_custom_call.1} parent=1 // pred_check
      _
    $region55: #{tpu_custom_call.1} parent=1 // pred_check_branch
      %566 = sbr.rel (0) target = $region57
    $region56: #{tpu_custom_call.1} parent=1 // pred_region
      %567 = dma.done [#allocation4], 128
    $region57: #{tpu_custom_call.1} parent=1 // pred_fallthru
      _
    %568 = vsyncpa [#allocation3], 1
    %569 = vsyncpa [#allocation6], 1
    %570 = vsyncpa [#allocation4], 1

</llo_original>
